<compile_context>
chip_gen: v7x
topology: tpu7x:2x2x1
jax: 0.10.0
libtpu: 0.0.40
codegen_flags: <defaults>
</compile_context>

<pallas_src>
import numpy as np
import jax
import jax.numpy as jnp
from jax.experimental import pallas as pl
from jax.experimental.pallas import tpu as pltpu


LANES = 1024        # lane-dense last dim (multiple of 128)
TM_MAX = 256        # 256 * 1024 * 4 B = 1 MiB per f32 block -> fits every chip's VMEM budget


def _scramble_binary_kernel(x_ref, s_ref, o_ref):
    # bit flip: |x - s| with s in {0, 1}
    o_ref[...] = jnp.abs(x_ref[...] - s_ref[...])


def _scramble_llr_kernel(x_ref, s_ref, o_ref):
    # sign flip in the LLR domain: x * (-2*s + 1)
    s = s_ref[...]
    o_ref[...] = x_ref[...] * (1.0 - 2.0 * s)


def scramble(x, seed, binary=True, keep_batch_constant=False, dtype=jnp.float32):
    """Pallas-backed Scrambler.forward.

    x                   : array of arbitrary shape (B, ...), rank >= 1
    seed                : Python int, defines the scrambling sequence (module xors it with 1337)
    binary              : True -> bit flipping, False -> sign flipping (LLR domain)
    keep_batch_constant : True -> one sequence broadcast over the batch dimension
    """
    x = jnp.asarray(x, dtype=dtype)
    orig_shape = x.shape

    # --- deterministic pseudo-random 0/1 scrambling sequence (mirrors
    #     torch.manual_seed(1337 ^ seed); torch.randint(0, 2, shape)) ---
    key = jax.random.PRNGKey(1337 ^ int(seed))
    if keep_batch_constant:
        seq = jax.random.randint(key, orig_shape[1:], 0, 2, dtype=jnp.int32)
        seq = jnp.broadcast_to(seq[None, ...], orig_shape)
    else:
        seq = jax.random.randint(key, orig_shape, 0, 2, dtype=jnp.int32)
    seq = seq.astype(dtype)

    # --- lane-dense slab: flatten, pad to a multiple of LANES, reshape (rows, LANES) ---
    total = int(np.prod(orig_shape)) if len(orig_shape) else 1
    rows = max(1, -(-total // LANES))
    padded = rows * LANES
    pad = padded - total
    x2 = jnp.pad(x.reshape(-1), (0, pad)).reshape(rows, LANES)
    s2 = jnp.pad(seq.reshape(-1), (0, pad)).reshape(rows, LANES)

    # block shape: either the whole (small) array or 8-divisible row tiles
    tm = rows if rows <= TM_MAX else TM_MAX
    grid = (pl.cdiv(rows, tm),)
    spec = pl.BlockSpec((tm, LANES), lambda i: (i, 0))

    kernel = _scramble_binary_kernel if binary else _scramble_llr_kernel

    out = pl.pallas_call(
        kernel,
        out_shape=jax.ShapeDtypeStruct((rows, LANES), dtype),
        grid=grid,
        in_specs=[spec, spec],
        out_specs=spec,
        compiler_params=pltpu.CompilerParams(
            dimension_semantics=("parallel",),
        ),
    )(x2, s2)

    return out.reshape(-1)[:total].reshape(orig_shape)


if __name__ == "__main__":
    key = jax.random.PRNGKey(0)
    k_bits, k_llr = jax.random.split(key)

    seed = 42
    shape = (2, 4, 16, 16)

    # --- binary (bit) scrambling ---
    x_bits = jax.random.bernoulli(k_bits, 0.5, shape).astype(jnp.float32)
    y = jax.block_until_ready(scramble(x_bits, seed, binary=True))
    assert y.shape == x_bits.shape and y.dtype == jnp.float32
    assert bool(jnp.all((y == 0.0) | (y == 1.0)))          # output still binary
    x_rec = jax.block_until_ready(scramble(y, seed, binary=True))
    assert bool(jnp.all(x_rec == x_bits))                  # self-inverse with same seed

    # --- soft-value (LLR / sign-flip) scrambling ---
    x_llr = jax.random.normal(k_llr, shape, dtype=jnp.float32)
    z = jax.block_until_ready(scramble(x_llr, seed, binary=False))
    assert z.shape == x_llr.shape
    assert bool(jnp.allclose(jnp.abs(z), jnp.abs(x_llr), atol=1e-6))   # only signs change
    z_rec = jax.block_until_ready(scramble(z, seed, binary=False))
    assert bool(jnp.allclose(z_rec, x_llr, atol=1e-6))

    # --- keep_batch_constant=True path (same sequence broadcast over batch) ---
    yb = jax.block_until_ready(scramble(x_bits, seed, binary=True, keep_batch_constant=True))
    xb_rec = jax.block_until_ready(scramble(yb, seed, binary=True, keep_batch_constant=True))
    assert bool(jnp.all(xb_rec == x_bits))

    print("KERNEL_OK")
</pallas_src>

<mosaic_0001>
module attributes {stable_mosaic.version = 11 : i64} {
  func.func @_scramble_binary_kernel(%arg0: i32, %arg1: memref<2x1024xf32, #tpu.memory_space<vmem>>, %arg2: memref<2x1024xf32, #tpu.memory_space<vmem>>, %arg3: memref<2x1024xf32, #tpu.memory_space<vmem>>) attributes {dimension_semantics = [#tpu.dimension_semantics<parallel>], iteration_bounds = array<i64: 1>, scalar_prefetch = 0 : i64, scratch_operands = 0 : i64, tpu.core_type = #tpu.core_type<tc>, window_params = [{transform_indices = @transform_0, window_bounds = array<i64: 2, 1024>}, {transform_indices = @transform_1, window_bounds = array<i64: 2, 1024>}, {transform_indices = @transform_2, window_bounds = array<i64: 2, 1024>}]} {
    %c0 = arith.constant 0 : index
    %c0_0 = arith.constant 0 : index
    %0 = vector.load %arg1[%c0, %c0_0] : memref<2x1024xf32, #tpu.memory_space<vmem>>, vector<2x1024xf32>
    %c0_1 = arith.constant 0 : index
    %c0_2 = arith.constant 0 : index
    %1 = vector.load %arg2[%c0_1, %c0_2] : memref<2x1024xf32, #tpu.memory_space<vmem>>, vector<2x1024xf32>
    %2 = arith.subf %0, %1 : vector<2x1024xf32>
    %3 = math.absf %2 : vector<2x1024xf32>
    %c0_3 = arith.constant 0 : index
    %c0_4 = arith.constant 0 : index
    %4 = vector.load %arg3[%c0_3, %c0_4] : memref<2x1024xf32, #tpu.memory_space<vmem>>, vector<2x1024xf32>
    tpu.vector_store %arg3[%c0_3, %c0_4], %3 {strides = array<i32>} : memref<2x1024xf32, #tpu.memory_space<vmem>>, vector<2x1024xf32>,
    return
  }
  func.func @transform_0(%arg0: i32) -> (i32, i32) {
    %c0_i32 = arith.constant 0 : i32
    %c0_i32_0 = arith.constant 0 : i32
    return %arg0, %c0_i32 : i32, i32
  }
  func.func @transform_1(%arg0: i32) -> (i32, i32) {
    %c0_i32 = arith.constant 0 : i32
    %c0_i32_0 = arith.constant 0 : i32
    return %arg0, %c0_i32 : i32, i32
  }
  func.func @transform_2(%arg0: i32) -> (i32, i32) {
    %c0_i32 = arith.constant 0 : i32
    %c0_i32_0 = arith.constant 0 : i32
    return %arg0, %c0_i32 : i32, i32
  }
}

</mosaic_0001>

<llo_original>
// kernel: tpu_custom_call.1
$region0: #{tpu_custom_call.1}
  #allocation0 [shape = 'u32[]', space=smem, size = 0x4, offset = 0x4, fixed_abs, tag = 'smem constant byte address 0x4 - core index']
  #allocation1 [shape = 'u32[144,128]{1,0:T(1,128)}', space=vmem, size = 0x12000, scoped, tag = 'internal scratch']
  %s0 = inlined_call_operand.hbm [shape: f32[2,1024], index: 0, kind: input, shape index: {}]
  %s1 = inlined_call_operand.hbm [shape: f32[2,1024], index: 1, kind: input, shape index: {}]
  %s2 = inlined_call_operand.hbm [shape: f32[2,1024], index: 2, kind: output, shape index: {}]
  %s3 = sld [smem:[#allocation0]]
  $region26: #{tpu_custom_call.1} parent=0
    _
  %s5 = ssub.s32 1, %s3
  %s6 = scalar_select 0, %s5, %s3
  $region1: #{tpu_custom_call.1} parent=0
    #allocation2 [shape = 'u8[8192]{0}', space=vmem, size = 0x2000, scoped, tag = 'input window, operand 0, single buffered']
    #allocation3 [shape = 's32[1]{0}', space=sflag, size = 0x4, scoped, tag = 'scoped memory for tpu_custom_call.1']
    #allocation4 [shape = 's32[1]{0}', space=sflag, size = 0x4, scoped, tag = 'scoped memory for tpu_custom_call.1']
    #allocation5 [shape = 'u8[8192]{0}', space=vmem, size = 0x2000, scoped, tag = 'input window, operand 1, single buffered']
    #allocation6 [shape = 's32[1]{0}', space=sflag, size = 0x4, scoped, tag = 'scoped memory for tpu_custom_call.1']
    #allocation7 [shape = 'u8[8192]{0}', space=vmem, size = 0x2000, scoped, tag = 'output window, operand 0, single buffered']
    %7 = vsyncpa [#allocation3], 0
    %8 = vsyncpa [#allocation6], 0
    %9 = vsyncpa [#allocation4], 0
    // Predicated region
    $region2: #{tpu_custom_call.1} parent=1 // pred_check
      _
    $region3: #{tpu_custom_call.1} parent=1 // pred_check_branch
      %11 = sbr.rel (0) target = $region5
    $region4: #{tpu_custom_call.1} parent=1 // pred_region
      %s13 = ssub.s32 256, 256
      %14 = vsyncadd [#allocation3], %s13
      %s16 = sshll.u32 [#allocation2], 4
      %s17 = int_to_ptr.vmem [resolvable:$true] %s16
      %19 = dma.hbm_to_vmem [thread:$0]  %s0, 256, %s17, [#allocation3]
    $region5: #{tpu_custom_call.1} parent=1 // pred_fallthru
      _
    // Predicated region
    $region6: #{tpu_custom_call.1} parent=1 // pred_check
      _
    $region7: #{tpu_custom_call.1} parent=1 // pred_check_branch
      %21 = sbr.rel (0) target = $region9
    $region8: #{tpu_custom_call.1} parent=1 // pred_region
      %s23 = ssub.s32 256, 256
      %24 = vsyncadd [#allocation6], %s23
      %s26 = sshll.u32 [#allocation5], 4
      %s27 = int_to_ptr.vmem [resolvable:$true] %s26
      %29 = dma.hbm_to_vmem [thread:$0]  %s1, 256, %s27, [#allocation6]
    $region9: #{tpu_custom_call.1} parent=1 // pred_fallthru
      _
    // Predicated region
    $region10: #{tpu_custom_call.1} parent=1 // pred_check
      _
    $region11: #{tpu_custom_call.1} parent=1 // pred_check_branch
      %31 = sbr.rel (0) target = $region13
    $region12: #{tpu_custom_call.1} parent=1 // pred_region
      %32 = dma.done [#allocation3], 256
    $region13: #{tpu_custom_call.1} parent=1 // pred_fallthru
      _
    // Predicated region
    $region14: #{tpu_custom_call.1} parent=1 // pred_check
      _
    $region15: #{tpu_custom_call.1} parent=1 // pred_check_branch
      %34 = sbr.rel (0) target = $region17
    $region16: #{tpu_custom_call.1} parent=1 // pred_region
      %35 = dma.done [#allocation6], 256
    $region17: #{tpu_custom_call.1} parent=1 // pred_fallthru
      _
    %v36 = vld [vmem:[#allocation2] sm:$0xff]
    %v37 = vld [vmem:[#allocation2 + $0x8] sm:$0xff]
    %v38 = vld [vmem:[#allocation5] sm:$0xff]
    %v39 = vld [vmem:[#allocation5 + $0x8] sm:$0xff]
    %v40 = vsub.f32 %v36, %v38
    %v41 = vsub.f32 %v37, %v39
    %v42 = vand.u32 2147483647, %v40
    %v43 = vand.u32 2147483647, %v41
    %44 = vst [vmem:[#allocation7] sm:$0xff] %v42
    %45 = vst [vmem:[#allocation7 + $0x8] sm:$0xff] %v43
    // Predicated region
    $region18: #{tpu_custom_call.1} parent=1 // pred_check
      _
    $region19: #{tpu_custom_call.1} parent=1 // pred_check_branch
      %47 = sbr.rel (0) target = $region21
    $region20: #{tpu_custom_call.1} parent=1 // pred_region
      %s49 = ssub.s32 256, 256
      %50 = vsyncadd [#allocation4], %s49
      %s52 = sshll.u32 [#allocation7], 4
      %s53 = int_to_ptr.vmem [resolvable:$true] %s52
      %55 = dma.vmem_to_hbm [thread:$0]  %s53, 256, %s2, [#allocation4]
    $region21: #{tpu_custom_call.1} parent=1 // pred_fallthru
      _
    // Predicated region
    $region22: #{tpu_custom_call.1} parent=1 // pred_check
      _
    $region23: #{tpu_custom_call.1} parent=1 // pred_check_branch
      %57 = sbr.rel (0) target = $region25
    $region24: #{tpu_custom_call.1} parent=1 // pred_region
      %58 = dma.done [#allocation4], 256
    $region25: #{tpu_custom_call.1} parent=1 // pred_fallthru
      _
    %59 = vsyncpa [#allocation3], 1
    %60 = vsyncpa [#allocation6], 1
    %61 = vsyncpa [#allocation4], 1

</llo_original>
